<compile_context>
chip_gen: v7x
topology: tpu7x:2x2x1
jax: 0.10.0
libtpu: 0.0.40
codegen_flags: <defaults>
</compile_context>

<pallas_src>
import jax
import jax.numpy as jnp
from jax.experimental import pallas as pl
from jax.experimental.pallas import tpu as pltpu

_LANES = 128   # vreg lane width
_CHUNK = 8     # sublanes per inner-loop chunk (one f32 vreg per value)


def _round_up(n, m):
    return ((n + m - 1) // m) * m


def _sigmoid(x):
    # sigmoid(x) = 0.5 * tanh(0.5 * x) + 0.5  -- single EUP op + mul + add.
    return 0.5 * jnp.tanh(0.5 * x) + 0.5


def xor_mlp_kernel(p_ref, x_ref, o_ref):
    # p_ref: (25,) packed params in SMEM.  Hoist every scalar read once.
    #   w1 (2,4): [0:8]   b1 (4,): [8:12]
    #   w2 (4,2): [12:20] b2 (2,): [20:22]
    #   w3 (2,1): [22:24] b3 (1,): [24]
    W1 = [[p_ref[i * 4 + j] for j in range(4)] for i in range(2)]
    B1 = [p_ref[8 + j] for j in range(4)]
    W2 = [[p_ref[12 + j * 2 + k] for k in range(2)] for j in range(4)]
    B2 = [p_ref[20 + k] for k in range(2)]
    W3 = [p_ref[22 + j] for j in range(2)]
    B3 = p_ref[24]

    n_chunks = o_ref.shape[0] // _CHUNK  # static

    # Process the (s_tile, 128) block in (8,128) chunks: keeps the ~12 live
    # intermediates (x0, x1, 4x h1, 2x h2, temporaries) well under 64 vregs.
    @pl.loop(0, n_chunks)
    def _(c):
        off = pl.multiple_of(c * _CHUNK, _CHUNK)
        x0 = x_ref[0, pl.ds(off, _CHUNK), :]   # (8, 128) dense
        x1 = x_ref[1, pl.ds(off, _CHUNK), :]   # (8, 128) dense

        # layer 1: 2 -> 4  (VPU broadcast-FMAs, unrolled at trace time)
        h1 = [_sigmoid(W1[0][j] * x0 + W1[1][j] * x1 + B1[j]) for j in range(4)]

        # layer 2: 4 -> 2
        h2 = [
            _sigmoid(W2[0][k] * h1[0] + W2[1][k] * h1[1]
                     + W2[2][k] * h1[2] + W2[3][k] * h1[3] + B2[k])
            for k in range(2)
        ]

        # layer 3: 2 -> 1
        out = _sigmoid(W3[0] * h2[0] + W3[1] * h2[1] + B3)
        o_ref[pl.ds(off, _CHUNK), :] = out.astype(o_ref.dtype)


def three_layer_xor_net(x, params, *, max_s_tile=512):
    """x: (batch, 2) float32. params: dict with (in, out)-layout weights, 1-D biases.
    Returns (batch, 1) float32."""
    w1, b1 = params["w1"], params["b1"]
    w2, b2 = params["w2"], params["b2"]
    w3, b3 = params["w3"], params["b3"]

    # Pack all 25 scalars into one 1-D SMEM array (avoids 2-D SMEM padding).
    pvec = jnp.concatenate([
        w1.reshape(-1), b1.reshape(-1),
        w2.reshape(-1), b2.reshape(-1),
        w3.reshape(-1), b3.reshape(-1),
    ]).astype(jnp.float32)

    batch = x.shape[0]

    # Sublane+lane dense layout: batch -> (S, 128) with S a multiple of 8.
    s_total = _round_up(max(batch, 1), _LANES * _CHUNK) // _LANES
    s_tile = min(max_s_tile, s_total)
    # v7x megacore: prefer >= 2 grid steps when there is enough work
    # (no effect on v5e/v6e which have a single TensorCore).
    if s_tile == s_total and s_total >= 2 * _CHUNK and s_total % (2 * _CHUNK) == 0:
        s_tile = s_total // 2
    num_steps = pl.cdiv(s_total, s_tile)
    s_total = num_steps * s_tile
    pb = s_total * _LANES

    # One fused transpose+pad copy; the reshape to (2, S, 128) is a free view.
    # (For peak end-to-end bandwidth the caller should hand us feature-major
    #  (2, S, 128) data directly and skip this copy.)
    xt = jnp.pad(x.astype(jnp.float32).T, ((0, 0), (0, pb - batch)))
    xt = xt.reshape(2, s_total, _LANES)

    smem = pl.BlockSpec(memory_space=pltpu.MemorySpace.SMEM)

    out = pl.pallas_call(
        xor_mlp_kernel,
        out_shape=jax.ShapeDtypeStruct((s_total, _LANES), jnp.float32),
        grid=(num_steps,),
        in_specs=[
            smem,                                                 # packed params (25,)
            pl.BlockSpec((2, s_tile, _LANES), lambda i: (0, i, 0)),  # x tile -> VMEM
        ],
        out_specs=pl.BlockSpec((s_tile, _LANES), lambda i: (i, 0)),
        compiler_params=pltpu.CompilerParams(
            dimension_semantics=("parallel",)),
    )(pvec, xt)

    # (pb,) view -> slice real batch -> (batch, 1)
    return out.reshape(-1)[:batch].reshape(batch, 1)


def init_params(key):
    """Deterministic init mimicking nn.Linear's uniform(-1/sqrt(fan_in), ...)."""
    def linear(k, fan_in, fan_out):
        kw, kb = jax.random.split(k)
        bound = 1.0 / jnp.sqrt(jnp.float32(fan_in))
        w = jax.random.uniform(kw, (fan_in, fan_out), jnp.float32, -bound, bound)
        b = jax.random.uniform(kb, (fan_out,), jnp.float32, -bound, bound)
        return w, b

    k1, k2, k3 = jax.random.split(key, 3)
    w1, b1 = linear(k1, 2, 4)
    w2, b2 = linear(k2, 4, 2)
    w3, b3 = linear(k3, 2, 1)
    return {"w1": w1, "b1": b1, "w2": w2, "b2": b2, "w3": w3, "b3": b3}


def reference_forward(x, p):
    h1 = jax.nn.sigmoid(x @ p["w1"] + p["b1"])
    h2 = jax.nn.sigmoid(h1 @ p["w2"] + p["b2"])
    return jax.nn.sigmoid(h2 @ p["w3"] + p["b3"])


if __name__ == "__main__":
    key = jax.random.PRNGKey(0)
    kp, kx1, kx2 = jax.random.split(key, 3)
    params = init_params(kp)

    # Small XOR-style batch: 8 samples, 2 features each.
    x_small = jax.random.uniform(kx1, (8, 2), jnp.float32)
    out_small = jax.block_until_ready(three_layer_xor_net(x_small, params))
    ref_small = reference_forward(x_small, params)
    assert out_small.shape == (8, 1), out_small.shape
    assert jnp.allclose(out_small, ref_small, atol=1e-5, rtol=1e-5)

    # Larger batch: exercises the multi-step grid + in-kernel chunk loop.
    x_big = jax.random.uniform(kx2, (4096, 2), jnp.float32)
    out_big = jax.block_until_ready(three_layer_xor_net(x_big, params))
    ref_big = reference_forward(x_big, params)
    assert out_big.shape == (4096, 1), out_big.shape
    assert jnp.allclose(out_big, ref_big, atol=1e-5, rtol=1e-5)

    print("KERNEL_OK")
</pallas_src>

<mosaic_0001>
module attributes {stable_mosaic.version = 11 : i64} {
  func.func @xor_mlp_kernel(%arg0: i32, %arg1: memref<25xf32, #tpu.memory_space<smem>>, %arg2: memref<2x8x128xf32, #tpu.memory_space<vmem>>, %arg3: memref<8x128xf32, #tpu.memory_space<vmem>>) attributes {dimension_semantics = [#tpu.dimension_semantics<parallel>], iteration_bounds = array<i64: 1>, scalar_prefetch = 0 : i64, scratch_operands = 0 : i64, tpu.core_type = #tpu.core_type<tc>, window_params = [{transform_indices = @transform_0, window_bounds = array<i64: 25>}, {transform_indices = @transform_1, window_bounds = array<i64: 2, 8, 128>}, {transform_indices = @transform_2, window_bounds = array<i64: 8, 128>}]} {
    %c0 = arith.constant 0 : index
    %0 = memref.load %arg1[%c0] : memref<25xf32, #tpu.memory_space<smem>>
    %c1 = arith.constant 1 : index
    %1 = memref.load %arg1[%c1] : memref<25xf32, #tpu.memory_space<smem>>
    %c2 = arith.constant 2 : index
    %2 = memref.load %arg1[%c2] : memref<25xf32, #tpu.memory_space<smem>>
    %c3 = arith.constant 3 : index
    %3 = memref.load %arg1[%c3] : memref<25xf32, #tpu.memory_space<smem>>
    %c4 = arith.constant 4 : index
    %4 = memref.load %arg1[%c4] : memref<25xf32, #tpu.memory_space<smem>>
    %c5 = arith.constant 5 : index
    %5 = memref.load %arg1[%c5] : memref<25xf32, #tpu.memory_space<smem>>
    %c6 = arith.constant 6 : index
    %6 = memref.load %arg1[%c6] : memref<25xf32, #tpu.memory_space<smem>>
    %c7 = arith.constant 7 : index
    %7 = memref.load %arg1[%c7] : memref<25xf32, #tpu.memory_space<smem>>
    %c8 = arith.constant 8 : index
    %8 = memref.load %arg1[%c8] : memref<25xf32, #tpu.memory_space<smem>>
    %c9 = arith.constant 9 : index
    %9 = memref.load %arg1[%c9] : memref<25xf32, #tpu.memory_space<smem>>
    %c10 = arith.constant 10 : index
    %10 = memref.load %arg1[%c10] : memref<25xf32, #tpu.memory_space<smem>>
    %c11 = arith.constant 11 : index
    %11 = memref.load %arg1[%c11] : memref<25xf32, #tpu.memory_space<smem>>
    %c12 = arith.constant 12 : index
    %12 = memref.load %arg1[%c12] : memref<25xf32, #tpu.memory_space<smem>>
    %c13 = arith.constant 13 : index
    %13 = memref.load %arg1[%c13] : memref<25xf32, #tpu.memory_space<smem>>
    %c14 = arith.constant 14 : index
    %14 = memref.load %arg1[%c14] : memref<25xf32, #tpu.memory_space<smem>>
    %c15 = arith.constant 15 : index
    %15 = memref.load %arg1[%c15] : memref<25xf32, #tpu.memory_space<smem>>
    %c16 = arith.constant 16 : index
    %16 = memref.load %arg1[%c16] : memref<25xf32, #tpu.memory_space<smem>>
    %c17 = arith.constant 17 : index
    %17 = memref.load %arg1[%c17] : memref<25xf32, #tpu.memory_space<smem>>
    %c18 = arith.constant 18 : index
    %18 = memref.load %arg1[%c18] : memref<25xf32, #tpu.memory_space<smem>>
    %c19 = arith.constant 19 : index
    %19 = memref.load %arg1[%c19] : memref<25xf32, #tpu.memory_space<smem>>
    %c20 = arith.constant 20 : index
    %20 = memref.load %arg1[%c20] : memref<25xf32, #tpu.memory_space<smem>>
    %c21 = arith.constant 21 : index
    %21 = memref.load %arg1[%c21] : memref<25xf32, #tpu.memory_space<smem>>
    %c22 = arith.constant 22 : index
    %22 = memref.load %arg1[%c22] : memref<25xf32, #tpu.memory_space<smem>>
    %c23 = arith.constant 23 : index
    %23 = memref.load %arg1[%c23] : memref<25xf32, #tpu.memory_space<smem>>
    %c24 = arith.constant 24 : index
    %24 = memref.load %arg1[%c24] : memref<25xf32, #tpu.memory_space<smem>>
    %c0_i32 = arith.constant 0 : i32
    %c1_i32 = arith.constant 1 : i32
    %25 = arith.muli %c0_i32, %c1_i32 : i32
    %c0_i32_0 = arith.constant 0 : i32
    %26 = arith.addi %c0_i32_0, %25 : i32
    %c8_i32 = arith.constant 8 : i32
    %27 = arith.muli %26, %c8_i32 : i32
    %28 = tpu.assume_multiple %27, 8 : i32
    %c0_1 = arith.constant 0 : index
    %29 = arith.index_cast %28 : i32 to index
    %c0_2 = arith.constant 0 : index
    %30 = vector.load %arg2[%c0_1, %29, %c0_2] : memref<2x8x128xf32, #tpu.memory_space<vmem>>, vector<1x8x128xf32>
    %31 = vector.shape_cast %30 : vector<1x8x128xf32> to vector<8x128xf32>
    %c1_3 = arith.constant 1 : index
    %32 = arith.index_cast %28 : i32 to index
    %c0_4 = arith.constant 0 : index
    %33 = vector.load %arg2[%c1_3, %32, %c0_4] : memref<2x8x128xf32, #tpu.memory_space<vmem>>, vector<1x8x128xf32>
    %34 = vector.shape_cast %33 : vector<1x8x128xf32> to vector<8x128xf32>
    %35 = vector.broadcast %0 : f32 to vector<8x128xf32>
    %36 = arith.mulf %35, %31 : vector<8x128xf32>
    %37 = vector.broadcast %4 : f32 to vector<8x128xf32>
    %38 = arith.mulf %37, %34 : vector<8x128xf32>
    %39 = arith.addf %36, %38 : vector<8x128xf32>
    %40 = vector.broadcast %8 : f32 to vector<8x128xf32>
    %41 = arith.addf %39, %40 : vector<8x128xf32>
    %cst = arith.constant 5.000000e-01 : f32
    %42 = vector.broadcast %cst : f32 to vector<8x128xf32>
    %43 = arith.mulf %42, %41 : vector<8x128xf32>
    %44 = math.tanh %43 : vector<8x128xf32>
    %cst_5 = arith.constant 5.000000e-01 : f32
    %45 = vector.broadcast %cst_5 : f32 to vector<8x128xf32>
    %46 = arith.mulf %45, %44 : vector<8x128xf32>
    %cst_6 = arith.constant 5.000000e-01 : f32
    %47 = vector.broadcast %cst_6 : f32 to vector<8x128xf32>
    %48 = arith.addf %46, %47 : vector<8x128xf32>
    %49 = vector.broadcast %1 : f32 to vector<8x128xf32>
    %50 = arith.mulf %49, %31 : vector<8x128xf32>
    %51 = vector.broadcast %5 : f32 to vector<8x128xf32>
    %52 = arith.mulf %51, %34 : vector<8x128xf32>
    %53 = arith.addf %50, %52 : vector<8x128xf32>
    %54 = vector.broadcast %9 : f32 to vector<8x128xf32>
    %55 = arith.addf %53, %54 : vector<8x128xf32>
    %cst_7 = arith.constant 5.000000e-01 : f32
    %56 = vector.broadcast %cst_7 : f32 to vector<8x128xf32>
    %57 = arith.mulf %56, %55 : vector<8x128xf32>
    %58 = math.tanh %57 : vector<8x128xf32>
    %cst_8 = arith.constant 5.000000e-01 : f32
    %59 = vector.broadcast %cst_8 : f32 to vector<8x128xf32>
    %60 = arith.mulf %59, %58 : vector<8x128xf32>
    %cst_9 = arith.constant 5.000000e-01 : f32
    %61 = vector.broadcast %cst_9 : f32 to vector<8x128xf32>
    %62 = arith.addf %60, %61 : vector<8x128xf32>
    %63 = vector.broadcast %2 : f32 to vector<8x128xf32>
    %64 = arith.mulf %63, %31 : vector<8x128xf32>
    %65 = vector.broadcast %6 : f32 to vector<8x128xf32>
    %66 = arith.mulf %65, %34 : vector<8x128xf32>
    %67 = arith.addf %64, %66 : vector<8x128xf32>
    %68 = vector.broadcast %10 : f32 to vector<8x128xf32>
    %69 = arith.addf %67, %68 : vector<8x128xf32>
    %cst_10 = arith.constant 5.000000e-01 : f32
    %70 = vector.broadcast %cst_10 : f32 to vector<8x128xf32>
    %71 = arith.mulf %70, %69 : vector<8x128xf32>
    %72 = math.tanh %71 : vector<8x128xf32>
    %cst_11 = arith.constant 5.000000e-01 : f32
    %73 = vector.broadcast %cst_11 : f32 to vector<8x128xf32>
    %74 = arith.mulf %73, %72 : vector<8x128xf32>
    %cst_12 = arith.constant 5.000000e-01 : f32
    %75 = vector.broadcast %cst_12 : f32 to vector<8x128xf32>
    %76 = arith.addf %74, %75 : vector<8x128xf32>
    %77 = vector.broadcast %3 : f32 to vector<8x128xf32>
    %78 = arith.mulf %77, %31 : vector<8x128xf32>
    %79 = vector.broadcast %7 : f32 to vector<8x128xf32>
    %80 = arith.mulf %79, %34 : vector<8x128xf32>
    %81 = arith.addf %78, %80 : vector<8x128xf32>
    %82 = vector.broadcast %11 : f32 to vector<8x128xf32>
    %83 = arith.addf %81, %82 : vector<8x128xf32>
    %cst_13 = arith.constant 5.000000e-01 : f32
    %84 = vector.broadcast %cst_13 : f32 to vector<8x128xf32>
    %85 = arith.mulf %84, %83 : vector<8x128xf32>
    %86 = math.tanh %85 : vector<8x128xf32>
    %cst_14 = arith.constant 5.000000e-01 : f32
    %87 = vector.broadcast %cst_14 : f32 to vector<8x128xf32>
    %88 = arith.mulf %87, %86 : vector<8x128xf32>
    %cst_15 = arith.constant 5.000000e-01 : f32
    %89 = vector.broadcast %cst_15 : f32 to vector<8x128xf32>
    %90 = arith.addf %88, %89 : vector<8x128xf32>
    %91 = vector.broadcast %12 : f32 to vector<8x128xf32>
    %92 = arith.mulf %91, %48 : vector<8x128xf32>
    %93 = vector.broadcast %14 : f32 to vector<8x128xf32>
    %94 = arith.mulf %93, %62 : vector<8x128xf32>
    %95 = arith.addf %92, %94 : vector<8x128xf32>
    %96 = vector.broadcast %16 : f32 to vector<8x128xf32>
    %97 = arith.mulf %96, %76 : vector<8x128xf32>
    %98 = arith.addf %95, %97 : vector<8x128xf32>
    %99 = vector.broadcast %18 : f32 to vector<8x128xf32>
    %100 = arith.mulf %99, %90 : vector<8x128xf32>
    %101 = arith.addf %98, %100 : vector<8x128xf32>
    %102 = vector.broadcast %20 : f32 to vector<8x128xf32>
    %103 = arith.addf %101, %102 : vector<8x128xf32>
    %cst_16 = arith.constant 5.000000e-01 : f32
    %104 = vector.broadcast %cst_16 : f32 to vector<8x128xf32>
    %105 = arith.mulf %104, %103 : vector<8x128xf32>
    %106 = math.tanh %105 : vector<8x128xf32>
    %cst_17 = arith.constant 5.000000e-01 : f32
    %107 = vector.broadcast %cst_17 : f32 to vector<8x128xf32>
    %108 = arith.mulf %107, %106 : vector<8x128xf32>
    %cst_18 = arith.constant 5.000000e-01 : f32
    %109 = vector.broadcast %cst_18 : f32 to vector<8x128xf32>
    %110 = arith.addf %108, %109 : vector<8x128xf32>
    %111 = vector.broadcast %13 : f32 to vector<8x128xf32>
    %112 = arith.mulf %111, %48 : vector<8x128xf32>
    %113 = vector.broadcast %15 : f32 to vector<8x128xf32>
    %114 = arith.mulf %113, %62 : vector<8x128xf32>
    %115 = arith.addf %112, %114 : vector<8x128xf32>
    %116 = vector.broadcast %17 : f32 to vector<8x128xf32>
    %117 = arith.mulf %116, %76 : vector<8x128xf32>
    %118 = arith.addf %115, %117 : vector<8x128xf32>
    %119 = vector.broadcast %19 : f32 to vector<8x128xf32>
    %120 = arith.mulf %119, %90 : vector<8x128xf32>
    %121 = arith.addf %118, %120 : vector<8x128xf32>
    %122 = vector.broadcast %21 : f32 to vector<8x128xf32>
    %123 = arith.addf %121, %122 : vector<8x128xf32>
    %cst_19 = arith.constant 5.000000e-01 : f32
    %124 = vector.broadcast %cst_19 : f32 to vector<8x128xf32>
    %125 = arith.mulf %124, %123 : vector<8x128xf32>
    %126 = math.tanh %125 : vector<8x128xf32>
    %cst_20 = arith.constant 5.000000e-01 : f32
    %127 = vector.broadcast %cst_20 : f32 to vector<8x128xf32>
    %128 = arith.mulf %127, %126 : vector<8x128xf32>
    %cst_21 = arith.constant 5.000000e-01 : f32
    %129 = vector.broadcast %cst_21 : f32 to vector<8x128xf32>
    %130 = arith.addf %128, %129 : vector<8x128xf32>
    %131 = vector.broadcast %22 : f32 to vector<8x128xf32>
    %132 = arith.mulf %131, %110 : vector<8x128xf32>
    %133 = vector.broadcast %23 : f32 to vector<8x128xf32>
    %134 = arith.mulf %133, %130 : vector<8x128xf32>
    %135 = arith.addf %132, %134 : vector<8x128xf32>
    %136 = vector.broadcast %24 : f32 to vector<8x128xf32>
    %137 = arith.addf %135, %136 : vector<8x128xf32>
    %cst_22 = arith.constant 5.000000e-01 : f32
    %138 = vector.broadcast %cst_22 : f32 to vector<8x128xf32>
    %139 = arith.mulf %138, %137 : vector<8x128xf32>
    %140 = math.tanh %139 : vector<8x128xf32>
    %cst_23 = arith.constant 5.000000e-01 : f32
    %141 = vector.broadcast %cst_23 : f32 to vector<8x128xf32>
    %142 = arith.mulf %141, %140 : vector<8x128xf32>
    %cst_24 = arith.constant 5.000000e-01 : f32
    %143 = vector.broadcast %cst_24 : f32 to vector<8x128xf32>
    %144 = arith.addf %142, %143 : vector<8x128xf32>
    %145 = arith.index_cast %28 : i32 to index
    %c0_25 = arith.constant 0 : index
    %146 = vector.load %arg3[%145, %c0_25] : memref<8x128xf32, #tpu.memory_space<vmem>>, vector<8x128xf32>
    tpu.vector_store %arg3[%145, %c0_25], %144 {strides = array<i32>} : memref<8x128xf32, #tpu.memory_space<vmem>>, vector<8x128xf32>,
    %c1_i32_26 = arith.constant 1 : i32
    return
  }
  func.func @transform_0(%arg0: i32) -> i32 {
    %c0_i32 = arith.constant 0 : i32
    %c0_i32_0 = arith.constant 0 : i32
    return %c0_i32 : i32
  }
  func.func @transform_1(%arg0: i32) -> (i32, i32, i32) {
    %c0_i32 = arith.constant 0 : i32
    %c0_i32_0 = arith.constant 0 : i32
    %c0_i32_1 = arith.constant 0 : i32
    return %c0_i32, %arg0, %c0_i32_0 : i32, i32, i32
  }
  func.func @transform_2(%arg0: i32) -> (i32, i32) {
    %c0_i32 = arith.constant 0 : i32
    %c0_i32_0 = arith.constant 0 : i32
    return %arg0, %c0_i32 : i32, i32
  }
}

</mosaic_0001>

<llo_original>
// kernel: tpu_custom_call.1
$region0: #{tpu_custom_call.1}
  #allocation0 [shape = 'u32[]', space=smem, size = 0x4, offset = 0x4, fixed_abs, tag = 'smem constant byte address 0x4 - core index']
  #allocation1 [shape = 'u32[144,128]{1,0:T(1,128)}', space=vmem, size = 0x12000, scoped, tag = 'internal scratch']
  %s0 = inlined_call_operand.hbm [shape: f32[25], index: 0, kind: input, shape index: {}]
  %s1 = inlined_call_operand.hbm [shape: f32[2,8,128], index: 1, kind: input, shape index: {}]
  %s2 = inlined_call_operand.hbm [shape: f32[8,128], index: 2, kind: output, shape index: {}]
  %s3 = sld [smem:[#allocation0]]
  $region26: #{tpu_custom_call.1} parent=0
    _
  %s5 = ssub.s32 1, %s3
  %s6 = scalar_select 0, %s5, %s3
  $region1: #{tpu_custom_call.1} parent=0
    #allocation2 [shape = 'u8[512]{0}', space=smem, size = 0x200, scoped, tag = 'input window, operand 0, single buffered']
    #allocation3 [shape = 's32[1]{0}', space=sflag, size = 0x4, scoped, tag = 'scoped memory for tpu_custom_call.1']
    #allocation4 [shape = 's32[1]{0}', space=sflag, size = 0x4, scoped, tag = 'scoped memory for tpu_custom_call.1']
    #allocation5 [shape = 's32[1]{0}', space=sflag, size = 0x4, scoped, tag = 'scoped memory for tpu_custom_call.1']
    #allocation6 [shape = 'u8[8192]{0}', space=vmem, size = 0x2000, scoped, tag = 'input window, operand 1, single buffered']
    #allocation7 [shape = 'u8[4096]{0}', space=vmem, size = 0x1000, scoped, tag = 'output window, operand 0, single buffered']
    %7 = vsyncpa [#allocation5], 0
    %8 = vsyncpa [#allocation3], 0
    %9 = vsyncpa [#allocation4], 0
    // Predicated region
    $region2: #{tpu_custom_call.1} parent=1 // pred_check
      _
    $region3: #{tpu_custom_call.1} parent=1 // pred_check_branch
      %11 = sbr.rel (0) target = $region5
    $region4: #{tpu_custom_call.1} parent=1 // pred_region
      %s13 = ssub.s32 16, 16
      %14 = vsyncadd [#allocation5], %s13
      %17 = dma.hbm_to_smem %s0, 16, [#allocation2], [#allocation5]
    $region5: #{tpu_custom_call.1} parent=1 // pred_fallthru
      _
    // Predicated region
    $region6: #{tpu_custom_call.1} parent=1 // pred_check
      _
    $region7: #{tpu_custom_call.1} parent=1 // pred_check_branch
      %19 = sbr.rel (0) target = $region9
    $region8: #{tpu_custom_call.1} parent=1 // pred_region
      %s21 = ssub.s32 256, 256
      %22 = vsyncadd [#allocation3], %s21
      %s23 = sshll.u32 [#allocation6], 4
      %s24 = int_to_ptr.vmem [resolvable:$true] %s23
      %29 = dma.hbm_to_vmem [thread:$0]  %s1, 256, %s24, [#allocation3], 128, 128, 8
    $region9: #{tpu_custom_call.1} parent=1 // pred_fallthru
      _
    // Predicated region
    $region10: #{tpu_custom_call.1} parent=1 // pred_check
      _
    $region11: #{tpu_custom_call.1} parent=1 // pred_check_branch
      %31 = sbr.rel (0) target = $region13
    $region12: #{tpu_custom_call.1} parent=1 // pred_region
      %32 = dma.done [#allocation5], 16
    $region13: #{tpu_custom_call.1} parent=1 // pred_fallthru
      _
    // Predicated region
    $region14: #{tpu_custom_call.1} parent=1 // pred_check
      _
    $region15: #{tpu_custom_call.1} parent=1 // pred_check_branch
      %34 = sbr.rel (0) target = $region17
    $region16: #{tpu_custom_call.1} parent=1 // pred_region
      %35 = dma.done [#allocation3], 256
    $region17: #{tpu_custom_call.1} parent=1 // pred_fallthru
      _
    %36 = sfence
    %s37 = sld [smem:[#allocation2]]
    %s38 = sld [smem:[#allocation2 + $0x1]]
    %s39 = sld [smem:[#allocation2 + $0x2]]
    %s40 = sld [smem:[#allocation2 + $0x3]]
    %s41 = sld [smem:[#allocation2 + $0x4]]
    %s42 = sld [smem:[#allocation2 + $0x5]]
    %s43 = sld [smem:[#allocation2 + $0x6]]
    %s44 = sld [smem:[#allocation2 + $0x7]]
    %s45 = sld [smem:[#allocation2 + $0x8]]
    %s46 = sld [smem:[#allocation2 + $0x9]]
    %s47 = sld [smem:[#allocation2 + $0xa]]
    %s48 = sld [smem:[#allocation2 + $0xb]]
    %s49 = sld [smem:[#allocation2 + $0xc]]
    %s50 = sld [smem:[#allocation2 + $0xd]]
    %s51 = sld [smem:[#allocation2 + $0xe]]
    %s52 = sld [smem:[#allocation2 + $0xf]]
    %s53 = sld [smem:[#allocation2 + $0x10]]
    %s54 = sld [smem:[#allocation2 + $0x11]]
    %s55 = sld [smem:[#allocation2 + $0x12]]
    %s56 = sld [smem:[#allocation2 + $0x13]]
    %s57 = sld [smem:[#allocation2 + $0x14]]
    %s58 = sld [smem:[#allocation2 + $0x15]]
    %s59 = sld [smem:[#allocation2 + $0x16]]
    %s60 = sld [smem:[#allocation2 + $0x17]]
    %s61 = sld [smem:[#allocation2 + $0x18]]
    %v62 = vld [vmem:[#allocation6] sm:$0xff]
    %s63 = sadd.s32 0, 8
    %s64 = scalar_lea.vmem [#allocation6], %s63
    %v65 = vld [vmem:[%s64] sm:$0xff]
    %v66 = vstv %s37
    %v67 = vmul.f32 %v66, %v62
    %v68 = vstv %s41
    %v69 = vmul.f32 %v68, %v65
    %v70 = vadd.f32 %v67, %v69
    %v71 = vstv %s45
    %v72 = vadd.f32 %v70, %v71
    %v73 = vmul.f32 %v72, 0.5
    %v74 = vtanh.pop %v73
    %v75 = vmul.f32 %v74, 0.5
    %v76 = vadd.f32 %v75, 0.5
    %v77 = vstv %s38
    %v78 = vmul.f32 %v77, %v62
    %v79 = vstv %s42
    %v80 = vmul.f32 %v79, %v65
    %v81 = vadd.f32 %v78, %v80
    %v82 = vstv %s46
    %v83 = vadd.f32 %v81, %v82
    %v84 = vmul.f32 %v83, 0.5
    %v85 = vtanh.pop %v84
    %v86 = vmul.f32 %v85, 0.5
    %v87 = vadd.f32 %v86, 0.5
    %v88 = vstv %s39
    %v89 = vmul.f32 %v88, %v62
    %v90 = vstv %s43
    %v91 = vmul.f32 %v90, %v65
    %v92 = vadd.f32 %v89, %v91
    %v93 = vstv %s47
    %v94 = vadd.f32 %v92, %v93
    %v95 = vmul.f32 %v94, 0.5
    %v96 = vtanh.pop %v95
    %v97 = vmul.f32 %v96, 0.5
    %v98 = vadd.f32 %v97, 0.5
    %v99 = vstv %s40
    %v100 = vmul.f32 %v99, %v62
    %v101 = vstv %s44
    %v102 = vmul.f32 %v101, %v65
    %v103 = vadd.f32 %v100, %v102
    %v104 = vstv %s48
    %v105 = vadd.f32 %v103, %v104
    %v106 = vmul.f32 %v105, 0.5
    %v107 = vtanh.pop %v106
    %v108 = vmul.f32 %v107, 0.5
    %v109 = vadd.f32 %v108, 0.5
    %v110 = vstv %s49
    %v111 = vmul.f32 %v110, %v76
    %v112 = vstv %s51
    %v113 = vmul.f32 %v112, %v87
    %v114 = vadd.f32 %v111, %v113
    %v115 = vstv %s53
    %v116 = vmul.f32 %v115, %v98
    %v117 = vadd.f32 %v114, %v116
    %v118 = vstv %s55
    %v119 = vmul.f32 %v118, %v109
    %v120 = vadd.f32 %v117, %v119
    %v121 = vstv %s57
    %v122 = vadd.f32 %v120, %v121
    %v123 = vmul.f32 %v122, 0.5
    %v124 = vtanh.pop %v123
    %v125 = vmul.f32 %v124, 0.5
    %v126 = vadd.f32 %v125, 0.5
    %v127 = vstv %s50
    %v128 = vmul.f32 %v127, %v76
    %v129 = vstv %s52
    %v130 = vmul.f32 %v129, %v87
    %v131 = vadd.f32 %v128, %v130
    %v132 = vstv %s54
    %v133 = vmul.f32 %v132, %v98
    %v134 = vadd.f32 %v131, %v133
    %v135 = vstv %s56
    %v136 = vmul.f32 %v135, %v109
    %v137 = vadd.f32 %v134, %v136
    %v138 = vstv %s58
    %v139 = vadd.f32 %v137, %v138
    %v140 = vmul.f32 %v139, 0.5
    %v141 = vtanh.pop %v140
    %v142 = vmul.f32 %v141, 0.5
    %v143 = vadd.f32 %v142, 0.5
    %v144 = vstv %s59
    %v145 = vmul.f32 %v144, %v126
    %v146 = vstv %s60
    %v147 = vmul.f32 %v146, %v143
    %v148 = vadd.f32 %v145, %v147
    %v149 = vstv %s61
    %v150 = vadd.f32 %v148, %v149
    %v151 = vmul.f32 %v150, 0.5
    %v152 = vtanh.pop %v151
    %v153 = vmul.f32 %v152, 0.5
    %v154 = vadd.f32 %v153, 0.5
    %155 = vst [vmem:[#allocation7] sm:$0xff] %v154
    // Predicated region
    $region18: #{tpu_custom_call.1} parent=1 // pred_check
      _
    $region19: #{tpu_custom_call.1} parent=1 // pred_check_branch
      %157 = sbr.rel (0) target = $region21
    $region20: #{tpu_custom_call.1} parent=1 // pred_region
      %s159 = ssub.s32 128, 128
      %160 = vsyncadd [#allocation4], %s159
      %s162 = sshll.u32 [#allocation7], 4
      %s163 = int_to_ptr.vmem [resolvable:$true] %s162
      %165 = dma.vmem_to_hbm [thread:$0]  %s163, 128, %s2, [#allocation4]
    $region21: #{tpu_custom_call.1} parent=1 // pred_fallthru
      _
    // Predicated region
    $region22: #{tpu_custom_call.1} parent=1 // pred_check
      _
    $region23: #{tpu_custom_call.1} parent=1 // pred_check_branch
      %167 = sbr.rel (0) target = $region25
    $region24: #{tpu_custom_call.1} parent=1 // pred_region
      %168 = dma.done [#allocation4], 128
    $region25: #{tpu_custom_call.1} parent=1 // pred_fallthru
      _
    %169 = vsyncpa [#allocation3], 1
    %170 = vsyncpa [#allocation4], 1
    %171 = vsyncpa [#allocation5], 1

</llo_original>
